<compile_context>
chip_gen: v7x
topology: tpu7x:2x2x1
jax: 0.10.0
libtpu: 0.0.40
codegen_flags: <defaults>
</compile_context>

<pallas_src>
import functools

import jax
import jax.numpy as jnp
from jax.experimental import pallas as pl
from jax.experimental.pallas import tpu as pltpu

LANE = 128             # vreg lane width
SUB = 8                # f32 sublanes per vreg
CHUNK_ROWS = 256       # in-kernel compute chunk (multiple of 16: bf16-safe)
NUM_TC_SPLIT = 2       # row-range split across the (up to) 2 TCs on v7x
VMEM_LIMIT_BYTES = 40 * 1024 * 1024


def _cdiv(a, b):
    return -(-a // b)


def _round_down(x, m):
    return (x // m) * m


def _pearson_sums_kernel(a_ref, b_ref, acc_ref, *, rows, tr, chunk, bpc,
                         needs_mask):
    """Accumulate (8,128) vreg-shaped partial sums of a, b, a*b, a*a, b*b.

    a_ref/b_ref: (tr, 128) input blocks.
    acc_ref: (1, 5, 8, 128) f32 output block, one per core, resident across
    the inner (arbitrary) grid axis.
    """
    c = pl.program_id(0)
    i = pl.program_id(1)
    nchunks = tr // chunk  # static

    @pl.when(i == 0)
    def _init():
        acc_ref[...] = jnp.zeros_like(acc_ref)

    def process_chunk(j, masked, start_row):
        r0 = pl.multiple_of(j * chunk, 8)
        a = a_ref[pl.ds(r0, chunk), :].astype(jnp.float32)
        b = b_ref[pl.ds(r0, chunk), :].astype(jnp.float32)
        if masked:
            row_ids = start_row + r0 + jax.lax.broadcasted_iota(
                jnp.int32, (chunk, LANE), 0)
            keep = row_ids < rows
            a = jnp.where(keep, a, 0.0)
            b = jnp.where(keep, b, 0.0)
        # (chunk,128) -> (chunk//8, 8, 128) is a leading-dim split (layout
        # preserving); reducing axis 0 keeps everything as pure VPU vreg adds.
        a3 = a.reshape(chunk // SUB, SUB, LANE)
        b3 = b.reshape(chunk // SUB, SUB, LANE)
        acc_ref[0, 0, :, :] = acc_ref[0, 0, :, :] + jnp.sum(a3, axis=0)
        acc_ref[0, 1, :, :] = acc_ref[0, 1, :, :] + jnp.sum(b3, axis=0)
        acc_ref[0, 2, :, :] = acc_ref[0, 2, :, :] + jnp.sum(a3 * b3, axis=0)
        acc_ref[0, 3, :, :] = acc_ref[0, 3, :, :] + jnp.sum(a3 * a3, axis=0)
        acc_ref[0, 4, :, :] = acc_ref[0, 4, :, :] + jnp.sum(b3 * b3, axis=0)

    if not needs_mask:
        # Every grid step covers a full block: lean path only (static).
        @pl.loop(0, nchunks)
        def _all(j):
            process_chunk(j, False, 0)
    else:
        # Only the ragged / out-of-range step(s) pay for the masking ops.
        start_row = (c * bpc + i) * tr
        is_full = start_row + tr <= rows

        @pl.when(is_full)
        def _full():
            @pl.loop(0, nchunks)
            def _(j):
                process_chunk(j, False, 0)

        @pl.when(jnp.logical_not(is_full))
        def _partial():
            @pl.loop(0, nchunks)
            def _(j):
                process_chunk(j, True, start_row)


def _pearson_sums_pallas(a2d, b2d, rows, target_block_bytes):
    """Five global sums via a streaming, HBM-bound Pallas reduction."""
    a_item = jnp.dtype(a2d.dtype).itemsize
    b_item = jnp.dtype(b2d.dtype).itemsize
    pack = max(1, 4 // a_item, 4 // b_item)
    row_mult = SUB * pack              # 8 rows for f32 tiles, 16 for bf16/f16

    if rows <= CHUNK_ROWS:
        chunk = _round_down(rows, row_mult)
        tr = chunk
    else:
        chunk = CHUNK_ROWS
        tr = max(target_block_bytes // (LANE * max(a_item, b_item)), chunk)
        tr = _round_down(tr, chunk)
        tr = min(tr, _round_down(rows, chunk))

    nblocks = _cdiv(rows, tr)
    ncores = NUM_TC_SPLIT if nblocks >= NUM_TC_SPLIT else 1
    bpc = _cdiv(nblocks, ncores)                 # blocks per core
    needs_mask = (rows % tr != 0) or (ncores * bpc != nblocks)

    def in_idx(c, i):
        # Clamp: the (at most one) out-of-range step of the core split
        # re-reads the last block instead of issuing an OOB DMA; its
        # contribution is masked to zero in the kernel.
        return (jnp.minimum(c * bpc + i, nblocks - 1), 0)

    kernel = functools.partial(
        _pearson_sums_kernel, rows=rows, tr=tr, chunk=chunk, bpc=bpc,
        needs_mask=needs_mask)

    n = rows * LANE
    acc = pl.pallas_call(
        kernel,
        out_shape=jax.ShapeDtypeStruct((ncores, 5, SUB, LANE), jnp.float32),
        grid_spec=pltpu.PrefetchScalarGridSpec(
            num_scalar_prefetch=0,
            grid=(ncores, bpc),
            in_specs=[
                pl.BlockSpec((tr, LANE), in_idx),
                pl.BlockSpec((tr, LANE), in_idx),
            ],
            out_specs=pl.BlockSpec((1, 5, SUB, LANE),
                                   lambda c, i: (c, 0, 0, 0)),
        ),
        compiler_params=pltpu.CompilerParams(
            dimension_semantics=("parallel", "arbitrary"),
            vmem_limit_bytes=VMEM_LIMIT_BYTES,
        ),
        cost_estimate=pl.CostEstimate(
            flops=8 * n,
            transcendentals=0,
            bytes_accessed=n * (a_item + b_item),
        ),
    )(a2d, b2d)
    return jnp.sum(acc, axis=(0, 2, 3))


def _pearson_sums_jax(a, b):
    a = a.astype(jnp.float32)
    b = b.astype(jnp.float32)
    return jnp.stack([jnp.sum(a), jnp.sum(b), jnp.sum(a * b),
                      jnp.sum(a * a), jnp.sum(b * b)])


def _pearson_loss_from_sums(sums, n):
    n_f = jnp.float32(n)
    sum_a, sum_b, sum_ab, sum_a2, sum_b2 = (sums[k] for k in range(5))
    mean_a = sum_a / n_f
    mean_b = sum_b / n_f
    # sum((a-mean_a)*(b-mean_b)) = sum_ab - n*mean_a*mean_b, etc.
    cov = sum_ab - n_f * mean_a * mean_b
    var_a = jnp.maximum(sum_a2 - n_f * mean_a * mean_a, 0.0)  # clamp f32 drift
    var_b = jnp.maximum(sum_b2 - n_f * mean_b * mean_b, 0.0)
    loss = cov / (jnp.sqrt(var_a) * jnp.sqrt(var_b))
    return -loss


def pearson_correlation_loss(inputs, targets, *, target_block_bytes=4 << 20):
    """Matches PearsonCorrelationCoefficientLoss.forward(inputs, targets)."""
    assert inputs.shape == targets.shape
    flat_a = inputs.reshape(-1)
    flat_b = targets.reshape(-1)
    n = flat_a.shape[0]

    pack = max(1, 4 // jnp.dtype(flat_a.dtype).itemsize,
               4 // jnp.dtype(flat_b.dtype).itemsize)
    min_rows = SUB * pack

    if n % LANE == 0 and (n // LANE) >= min_rows:
        rows = n // LANE
        # Free (bitcast) reshape to a lane-dense 2-D view of the flat data.
        a2d = flat_a.reshape(rows, LANE)
        b2d = flat_b.reshape(rows, LANE)
        sums = _pearson_sums_pallas(a2d, b2d, rows, target_block_bytes)
    else:
        # Rare: n not a multiple of 128 (or tiny).  A fused XLA reduction
        # reads each input exactly once - cheaper than copying an aligned
        # prefix just to feed the kernel.
        sums = _pearson_sums_jax(flat_a, flat_b)

    return _pearson_loss_from_sums(sums, n)


def _reference(inputs, targets):
    x = inputs.astype(jnp.float32) - jnp.mean(inputs.astype(jnp.float32))
    y = targets.astype(jnp.float32) - jnp.mean(targets.astype(jnp.float32))
    return -(jnp.sum(x * y)
             / (jnp.sqrt(jnp.sum(x ** 2)) * jnp.sqrt(jnp.sum(y ** 2))))


def _check(inputs, targets, rtol, atol, **kw):
    loss = jax.block_until_ready(
        pearson_correlation_loss(inputs, targets, **kw))
    ref = _reference(inputs, targets)
    assert jnp.allclose(loss, ref, rtol=rtol, atol=atol), (loss, ref)


if __name__ == "__main__":
    key = jax.random.PRNGKey(0)
    k1, k2, k3, k4 = jax.random.split(key, 4)

    # 1) Spec-consistent NCHW input: (2, 4, 16, 16) f32 -> n = 2048.
    x = jax.random.normal(k1, (2, 4, 16, 16), dtype=jnp.float32)
    y = 0.5 * x + 0.5 * jax.random.normal(k2, (2, 4, 16, 16),
                                          dtype=jnp.float32)
    _check(x, y, rtol=1e-5, atol=1e-6)

    # 2) Exercises the 2-way core split and the masked ragged last block.
    xa = jax.random.normal(k3, (4, 75, 128), dtype=jnp.float32)
    ya = 0.5 * xa + 0.5 * jax.random.normal(k4, (4, 75, 128),
                                            dtype=jnp.float32)
    _check(xa, ya, rtol=1e-4, atol=1e-5)

    # 3) bf16 inputs: in-kernel upcast, multiple-of-16 row tiles.
    _check(xa.astype(jnp.bfloat16), ya.astype(jnp.bfloat16),
           rtol=1e-4, atol=1e-5)

    # 4) Odd block count at a small block-byte target: exercises the clamped
    #    out-of-range step of the core split and the multi-chunk inner loop.
    xb = jax.random.normal(k3, (10, 120, 128), dtype=jnp.float32)
    yb = 0.5 * xb + 0.5 * jax.random.normal(k4, (10, 120, 128),
                                            dtype=jnp.float32)
    _check(xb, yb, rtol=1e-4, atol=1e-5, target_block_bytes=256 * 1024)

    # 5) Lane-misaligned n -> fused-XLA fallback path.
    xc = jax.random.normal(k1, (3, 5, 7), dtype=jnp.float32)
    yc = jax.random.normal(k2, (3, 5, 7), dtype=jnp.float32)
    _check(xc, yc, rtol=1e-5, atol=1e-6)

    print("KERNEL_OK")
</pallas_src>

<mosaic_0001>
module attributes {stable_mosaic.version = 11 : i64} {
  func.func @_pearson_sums_kernel(%arg0: i32, %arg1: i32, %arg2: memref<16x128xf32, #tpu.memory_space<vmem>>, %arg3: memref<16x128xf32, #tpu.memory_space<vmem>>, %arg4: memref<1x5x8x128xf32, #tpu.memory_space<vmem>>) attributes {dimension_semantics = [#tpu.dimension_semantics<parallel>, #tpu.dimension_semantics<arbitrary>], iteration_bounds = array<i64: 1, 1>, scalar_prefetch = 0 : i64, scratch_operands = 0 : i64, tpu.core_type = #tpu.core_type<tc>, window_params = [{transform_indices = @transform_0, window_bounds = array<i64: 16, 128>}, {transform_indices = @transform_1, window_bounds = array<i64: 16, 128>}, {transform_indices = @transform_2, window_bounds = array<i64: 1, 5, 8, 128>}]} {
    %c0_i32 = arith.constant 0 : i32
    %0 = arith.cmpi eq, %arg1, %c0_i32 : i32
    %1 = arith.extui %0 : i1 to i32
    %c0_i32_0 = arith.constant 0 : i32
    %2 = arith.cmpi ne, %1, %c0_i32_0 : i32
    scf.if %2 {
      %cst_45 = arith.constant 0.000000e+00 : f32
      %51 = vector.broadcast %cst_45 : f32 to vector<1x5x8x128xf32>
      %c0_46 = arith.constant 0 : index
      %c0_47 = arith.constant 0 : index
      %c0_48 = arith.constant 0 : index
      %c0_49 = arith.constant 0 : index
      %52 = vector.load %arg4[%c0_46, %c0_47, %c0_48, %c0_49] : memref<1x5x8x128xf32, #tpu.memory_space<vmem>>, vector<1x5x8x128xf32>
      tpu.vector_store %arg4[%c0_46, %c0_47, %c0_48, %c0_49], %51 {strides = array<i32>} : memref<1x5x8x128xf32, #tpu.memory_space<vmem>>, vector<1x5x8x128xf32>,
    } else {
    }
    %c0_i32_1 = arith.constant 0 : i32
    %c1_i32 = arith.constant 1 : i32
    %3 = arith.muli %c0_i32_1, %c1_i32 : i32
    %c0_i32_2 = arith.constant 0 : i32
    %4 = arith.addi %c0_i32_2, %3 : i32
    %c16_i32 = arith.constant 16 : i32
    %5 = arith.muli %4, %c16_i32 : i32
    %6 = tpu.assume_multiple %5, 8 : i32
    %7 = arith.index_cast %6 : i32 to index
    %c0 = arith.constant 0 : index
    %8 = vector.load %arg2[%7, %c0] : memref<16x128xf32, #tpu.memory_space<vmem>>, vector<16x128xf32>
    %9 = arith.index_cast %6 : i32 to index
    %c0_3 = arith.constant 0 : index
    %10 = vector.load %arg3[%9, %c0_3] : memref<16x128xf32, #tpu.memory_space<vmem>>, vector<16x128xf32>
    %11 = vector.shape_cast %8 : vector<16x128xf32> to vector<2x8x128xf32>
    %12 = vector.shape_cast %10 : vector<16x128xf32> to vector<2x8x128xf32>
    %c0_4 = arith.constant 0 : index
    %c0_5 = arith.constant 0 : index
    %c0_6 = arith.constant 0 : index
    %c0_7 = arith.constant 0 : index
    %13 = vector.load %arg4[%c0_4, %c0_5, %c0_6, %c0_7] : memref<1x5x8x128xf32, #tpu.memory_space<vmem>>, vector<1x1x8x128xf32>
    %14 = vector.shape_cast %13 : vector<1x1x8x128xf32> to vector<8x128xf32>
    %cst = arith.constant dense<0.000000e+00> : vector<8x128xf32>
    %15 = vector.multi_reduction <add>, %11, %cst [0] : vector<2x8x128xf32> to vector<8x128xf32>
    %16 = arith.addf %14, %15 : vector<8x128xf32>
    %c0_8 = arith.constant 0 : index
    %c0_9 = arith.constant 0 : index
    %c0_10 = arith.constant 0 : index
    %c0_11 = arith.constant 0 : index
    %17 = vector.load %arg4[%c0_8, %c0_9, %c0_10, %c0_11] : memref<1x5x8x128xf32, #tpu.memory_space<vmem>>, vector<1x1x8x128xf32>
    %18 = vector.shape_cast %17 : vector<1x1x8x128xf32> to vector<8x128xf32>
    %19 = vector.shape_cast %16 : vector<8x128xf32> to vector<1x1x8x128xf32>
    tpu.vector_store %arg4[%c0_8, %c0_9, %c0_10, %c0_11], %19 {strides = array<i32>} : memref<1x5x8x128xf32, #tpu.memory_space<vmem>>, vector<1x1x8x128xf32>,
    %c0_12 = arith.constant 0 : index
    %c1 = arith.constant 1 : index
    %c0_13 = arith.constant 0 : index
    %c0_14 = arith.constant 0 : index
    %20 = vector.load %arg4[%c0_12, %c1, %c0_13, %c0_14] : memref<1x5x8x128xf32, #tpu.memory_space<vmem>>, vector<1x1x8x128xf32>
    %21 = vector.shape_cast %20 : vector<1x1x8x128xf32> to vector<8x128xf32>
    %cst_15 = arith.constant dense<0.000000e+00> : vector<8x128xf32>
    %22 = vector.multi_reduction <add>, %12, %cst_15 [0] : vector<2x8x128xf32> to vector<8x128xf32>
    %23 = arith.addf %21, %22 : vector<8x128xf32>
    %c0_16 = arith.constant 0 : index
    %c1_17 = arith.constant 1 : index
    %c0_18 = arith.constant 0 : index
    %c0_19 = arith.constant 0 : index
    %24 = vector.load %arg4[%c0_16, %c1_17, %c0_18, %c0_19] : memref<1x5x8x128xf32, #tpu.memory_space<vmem>>, vector<1x1x8x128xf32>
    %25 = vector.shape_cast %24 : vector<1x1x8x128xf32> to vector<8x128xf32>
    %26 = vector.shape_cast %23 : vector<8x128xf32> to vector<1x1x8x128xf32>
    tpu.vector_store %arg4[%c0_16, %c1_17, %c0_18, %c0_19], %26 {strides = array<i32>} : memref<1x5x8x128xf32, #tpu.memory_space<vmem>>, vector<1x1x8x128xf32>,
    %c0_20 = arith.constant 0 : index
    %c2 = arith.constant 2 : index
    %c0_21 = arith.constant 0 : index
    %c0_22 = arith.constant 0 : index
    %27 = vector.load %arg4[%c0_20, %c2, %c0_21, %c0_22] : memref<1x5x8x128xf32, #tpu.memory_space<vmem>>, vector<1x1x8x128xf32>
    %28 = vector.shape_cast %27 : vector<1x1x8x128xf32> to vector<8x128xf32>
    %29 = arith.mulf %11, %12 : vector<2x8x128xf32>
    %cst_23 = arith.constant dense<0.000000e+00> : vector<8x128xf32>
    %30 = vector.multi_reduction <add>, %29, %cst_23 [0] : vector<2x8x128xf32> to vector<8x128xf32>
    %31 = arith.addf %28, %30 : vector<8x128xf32>
    %c0_24 = arith.constant 0 : index
    %c2_25 = arith.constant 2 : index
    %c0_26 = arith.constant 0 : index
    %c0_27 = arith.constant 0 : index
    %32 = vector.load %arg4[%c0_24, %c2_25, %c0_26, %c0_27] : memref<1x5x8x128xf32, #tpu.memory_space<vmem>>, vector<1x1x8x128xf32>
    %33 = vector.shape_cast %32 : vector<1x1x8x128xf32> to vector<8x128xf32>
    %34 = vector.shape_cast %31 : vector<8x128xf32> to vector<1x1x8x128xf32>
    tpu.vector_store %arg4[%c0_24, %c2_25, %c0_26, %c0_27], %34 {strides = array<i32>} : memref<1x5x8x128xf32, #tpu.memory_space<vmem>>, vector<1x1x8x128xf32>,
    %c0_28 = arith.constant 0 : index
    %c3 = arith.constant 3 : index
    %c0_29 = arith.constant 0 : index
    %c0_30 = arith.constant 0 : index
    %35 = vector.load %arg4[%c0_28, %c3, %c0_29, %c0_30] : memref<1x5x8x128xf32, #tpu.memory_space<vmem>>, vector<1x1x8x128xf32>
    %36 = vector.shape_cast %35 : vector<1x1x8x128xf32> to vector<8x128xf32>
    %37 = arith.mulf %11, %11 : vector<2x8x128xf32>
    %cst_31 = arith.constant dense<0.000000e+00> : vector<8x128xf32>
    %38 = vector.multi_reduction <add>, %37, %cst_31 [0] : vector<2x8x128xf32> to vector<8x128xf32>
    %39 = arith.addf %36, %38 : vector<8x128xf32>
    %c0_32 = arith.constant 0 : index
    %c3_33 = arith.constant 3 : index
    %c0_34 = arith.constant 0 : index
    %c0_35 = arith.constant 0 : index
    %40 = vector.load %arg4[%c0_32, %c3_33, %c0_34, %c0_35] : memref<1x5x8x128xf32, #tpu.memory_space<vmem>>, vector<1x1x8x128xf32>
    %41 = vector.shape_cast %40 : vector<1x1x8x128xf32> to vector<8x128xf32>
    %42 = vector.shape_cast %39 : vector<8x128xf32> to vector<1x1x8x128xf32>
    tpu.vector_store %arg4[%c0_32, %c3_33, %c0_34, %c0_35], %42 {strides = array<i32>} : memref<1x5x8x128xf32, #tpu.memory_space<vmem>>, vector<1x1x8x128xf32>,
    %c0_36 = arith.constant 0 : index
    %c4 = arith.constant 4 : index
    %c0_37 = arith.constant 0 : index
    %c0_38 = arith.constant 0 : index
    %43 = vector.load %arg4[%c0_36, %c4, %c0_37, %c0_38] : memref<1x5x8x128xf32, #tpu.memory_space<vmem>>, vector<1x1x8x128xf32>
    %44 = vector.shape_cast %43 : vector<1x1x8x128xf32> to vector<8x128xf32>
    %45 = arith.mulf %12, %12 : vector<2x8x128xf32>
    %cst_39 = arith.constant dense<0.000000e+00> : vector<8x128xf32>
    %46 = vector.multi_reduction <add>, %45, %cst_39 [0] : vector<2x8x128xf32> to vector<8x128xf32>
    %47 = arith.addf %44, %46 : vector<8x128xf32>
    %c0_40 = arith.constant 0 : index
    %c4_41 = arith.constant 4 : index
    %c0_42 = arith.constant 0 : index
    %c0_43 = arith.constant 0 : index
    %48 = vector.load %arg4[%c0_40, %c4_41, %c0_42, %c0_43] : memref<1x5x8x128xf32, #tpu.memory_space<vmem>>, vector<1x1x8x128xf32>
    %49 = vector.shape_cast %48 : vector<1x1x8x128xf32> to vector<8x128xf32>
    %50 = vector.shape_cast %47 : vector<8x128xf32> to vector<1x1x8x128xf32>
    tpu.vector_store %arg4[%c0_40, %c4_41, %c0_42, %c0_43], %50 {strides = array<i32>} : memref<1x5x8x128xf32, #tpu.memory_space<vmem>>, vector<1x1x8x128xf32>,
    %c1_i32_44 = arith.constant 1 : i32
    return
  }
  func.func @transform_0(%arg0: i32, %arg1: i32) -> (i32, i32) {
    %c1_i32 = arith.constant 1 : i32
    %0 = arith.muli %arg0, %c1_i32 : i32
    %1 = arith.addi %0, %arg1 : i32
    %c0_i32 = arith.constant 0 : i32
    %2 = arith.minsi %1, %c0_i32 : i32
    %c0_i32_0 = arith.constant 0 : i32
    %c0_i32_1 = arith.constant 0 : i32
    return %2, %c0_i32_0 : i32, i32
  }
  func.func @transform_1(%arg0: i32, %arg1: i32) -> (i32, i32) {
    %c1_i32 = arith.constant 1 : i32
    %0 = arith.muli %arg0, %c1_i32 : i32
    %1 = arith.addi %0, %arg1 : i32
    %c0_i32 = arith.constant 0 : i32
    %2 = arith.minsi %1, %c0_i32 : i32
    %c0_i32_0 = arith.constant 0 : i32
    %c0_i32_1 = arith.constant 0 : i32
    return %2, %c0_i32_0 : i32, i32
  }
  func.func @transform_2(%arg0: i32, %arg1: i32) -> (i32, i32, i32, i32) {
    %c0_i32 = arith.constant 0 : i32
    %c0_i32_0 = arith.constant 0 : i32
    %c0_i32_1 = arith.constant 0 : i32
    %c0_i32_2 = arith.constant 0 : i32
    return %arg0, %c0_i32, %c0_i32_0, %c0_i32_1 : i32, i32, i32, i32
  }
}

</mosaic_0001>

<llo_original>
// kernel: tpu_custom_call.1
$region0: #{tpu_custom_call.1}
  #allocation0 [shape = 'u32[]', space=smem, size = 0x4, offset = 0x4, fixed_abs, tag = 'smem constant byte address 0x4 - core index']
  #allocation1 [shape = 'u32[144,128]{1,0:T(1,128)}', space=vmem, size = 0x12000, scoped, tag = 'internal scratch']
  %s0 = inlined_call_operand.hbm [shape: f32[16,128], index: 0, kind: input, shape index: {}]
  %s1 = inlined_call_operand.hbm [shape: f32[16,128], index: 1, kind: input, shape index: {}]
  %s2 = inlined_call_operand.hbm [shape: f32[1,5,8,128], index: 2, kind: output, shape index: {}]
  %s3 = sld [smem:[#allocation0]]
  $region30: #{tpu_custom_call.1} parent=0
    _
  %s5 = ssub.s32 1, %s3
  %s6 = scalar_select 0, %s5, %s3
  $region1: #{tpu_custom_call.1} parent=0
    #allocation2 [shape = 'u8[8192]{0}', space=vmem, size = 0x2000, scoped, tag = 'input window, operand 0, single buffered']
    #allocation3 [shape = 's32[1]{0}', space=sflag, size = 0x4, scoped, tag = 'scoped memory for tpu_custom_call.1']
    #allocation4 [shape = 's32[1]{0}', space=sflag, size = 0x4, scoped, tag = 'scoped memory for tpu_custom_call.1']
    #allocation5 [shape = 'u8[8192]{0}', space=vmem, size = 0x2000, scoped, tag = 'input window, operand 1, single buffered']
    #allocation6 [shape = 's32[1]{0}', space=sflag, size = 0x4, scoped, tag = 'scoped memory for tpu_custom_call.1']
    #allocation7 [shape = 'u8[20480]{0}', space=vmem, size = 0x5000, scoped, tag = 'output window, operand 0, single buffered']
    %7 = vsyncpa [#allocation3], 0
    %8 = vsyncpa [#allocation6], 0
    %9 = vsyncpa [#allocation4], 0
    // Predicated region
    $region2: #{tpu_custom_call.1} parent=1 // pred_check
      _
    $region3: #{tpu_custom_call.1} parent=1 // pred_check_branch
      %11 = sbr.rel (0) target = $region5
    $region4: #{tpu_custom_call.1} parent=1 // pred_region
      %s12 = sadd.s32 0, 0
      %p13 = scmp.lt.s32.totalorder %s12, 0
      %s14 = scalar_select %p13, %s12, 0
      %s15 = smul.u32 2, %s14
      %s17 = ssub.s32 256, 256
      %18 = vsyncadd [#allocation3], %s17
      %s19 = smul.addr %s15, 128
      %s20 = scalar_lea.hbm %s0, %s19
      %s21 = sshll.u32 [#allocation2], 4
      %s22 = int_to_ptr.vmem [resolvable:$true] %s21
      %27 = dma.hbm_to_vmem [thread:$0]  %s20, 256, %s22, [#allocation3], 128, 128, 8
    $region5: #{tpu_custom_call.1} parent=1 // pred_fallthru
      _
    // Predicated region
    $region6: #{tpu_custom_call.1} parent=1 // pred_check
      _
    $region7: #{tpu_custom_call.1} parent=1 // pred_check_branch
      %29 = sbr.rel (0) target = $region9
    $region8: #{tpu_custom_call.1} parent=1 // pred_region
      %s30 = sadd.s32 0, 0
      %p31 = scmp.lt.s32.totalorder %s30, 0
      %s32 = scalar_select %p31, %s30, 0
      %s33 = smul.u32 2, %s32
      %s35 = ssub.s32 256, 256
      %36 = vsyncadd [#allocation6], %s35
      %s37 = smul.addr %s33, 128
      %s38 = scalar_lea.hbm %s1, %s37
      %s39 = sshll.u32 [#allocation5], 4
      %s40 = int_to_ptr.vmem [resolvable:$true] %s39
      %45 = dma.hbm_to_vmem [thread:$0]  %s38, 256, %s40, [#allocation6], 128, 128, 8
    $region9: #{tpu_custom_call.1} parent=1 // pred_fallthru
      _
    // Predicated region
    $region10: #{tpu_custom_call.1} parent=1 // pred_check
      _
    $region11: #{tpu_custom_call.1} parent=1 // pred_check_branch
      %47 = sbr.rel (0) target = $region13
    $region12: #{tpu_custom_call.1} parent=1 // pred_region
      %48 = dma.done [#allocation3], 256
    $region13: #{tpu_custom_call.1} parent=1 // pred_fallthru
      _
    // Predicated region
    $region14: #{tpu_custom_call.1} parent=1 // pred_check
      _
    $region15: #{tpu_custom_call.1} parent=1 // pred_check_branch
      %50 = sbr.rel (0) target = $region17
    $region16: #{tpu_custom_call.1} parent=1 // pred_region
      %51 = dma.done [#allocation6], 256
    $region17: #{tpu_custom_call.1} parent=1 // pred_fallthru
      _
    %s52 = sadd.s32 0, 0
    %p53 = scmp.lt.s32.totalorder %s52, 0
    %s54 = scalar_select %p53, %s52, 0
    %s55 = smul.u32 2, %s54
    %s56 = sadd.s32 0, 0
    %p57 = scmp.lt.s32.totalorder %s56, 0
    %s58 = scalar_select %p57, %s56, 0
    %s59 = smul.u32 2, %s58
    %p60 = scmp.eq.s32.totalorder 0, 0
    // Predicated region
    $region18: #{tpu_custom_call.1} parent=1 // pred_check
      %p61 = pneg %p60
    $region19: #{tpu_custom_call.1} parent=1 // pred_check_branch
      %63 = sbr.rel (%p61) target = $region21
    $region20: #{tpu_custom_call.1} parent=1 // pred_region
      %64 = vst [vmem:[#allocation7] sm:$0xff] 0.0
      %65 = vst [vmem:[#allocation7 + $0x8] sm:$0xff] 0.0
      %66 = vst [vmem:[#allocation7 + $0x10] sm:$0xff] 0.0
      %67 = vst [vmem:[#allocation7 + $0x18] sm:$0xff] 0.0
      %68 = vst [vmem:[#allocation7 + $0x20] sm:$0xff] 0.0
    $region21: #{tpu_custom_call.1} parent=1 // pred_fallthru
      _
    %v69 = vld [vmem:[#allocation2] sm:$0xff]
    %v70 = vld [vmem:[#allocation2 + $0x8] sm:$0xff]
    %v71 = vld [vmem:[#allocation5] sm:$0xff]
    %v72 = vld [vmem:[#allocation5 + $0x8] sm:$0xff]
    %v73 = vld [vmem:[#allocation7] sm:$0xff]
    %v74 = vadd.f32 %v69, %v70
    %v75 = vadd.f32 %v73, %v74
    %76 = vst [vmem:[#allocation7] sm:$0xff] %v75
    %s77 = scalar_lea.vmem [#allocation7], 8
    %v78 = vld [vmem:[%s77] sm:$0xff]
    %v79 = vadd.f32 %v71, %v72
    %v80 = vadd.f32 %v78, %v79
    %81 = vst [vmem:[%s77] sm:$0xff] %v80
    %s82 = scalar_lea.vmem [#allocation7], 16
    %v83 = vld [vmem:[%s82] sm:$0xff]
    %v84 = vmul.f32 %v69, %v71
    %v85 = vmul.f32 %v70, %v72
    %v86 = vadd.f32 %v84, %v85
    %v87 = vadd.f32 %v83, %v86
    %88 = vst [vmem:[%s82] sm:$0xff] %v87
    %s89 = scalar_lea.vmem [#allocation7], 24
    %v90 = vld [vmem:[%s89] sm:$0xff]
    %v91 = vmul.f32 %v69, %v69
    %v92 = vmul.f32 %v70, %v70
    %v93 = vadd.f32 %v91, %v92
    %v94 = vadd.f32 %v90, %v93
    %95 = vst [vmem:[%s89] sm:$0xff] %v94
    %s96 = scalar_lea.vmem [#allocation7], 32
    %v97 = vld [vmem:[%s96] sm:$0xff]
    %v98 = vmul.f32 %v71, %v71
    %v99 = vmul.f32 %v72, %v72
    %v100 = vadd.f32 %v98, %v99
    %v101 = vadd.f32 %v97, %v100
    %102 = vst [vmem:[%s96] sm:$0xff] %v101
    // Predicated region
    $region22: #{tpu_custom_call.1} parent=1 // pred_check
      _
    $region23: #{tpu_custom_call.1} parent=1 // pred_check_branch
      %104 = sbr.rel (0) target = $region25
    $region24: #{tpu_custom_call.1} parent=1 // pred_region
      %s106 = ssub.s32 640, 640
      %107 = vsyncadd [#allocation4], %s106
      %s108 = sshll.u32 [#allocation7], 4
      %s109 = int_to_ptr.vmem [resolvable:$true] %s108
      %114 = dma.vmem_to_hbm [thread:$0]  %s109, 640, %s2, [#allocation4], 128, 128, 8
    $region25: #{tpu_custom_call.1} parent=1 // pred_fallthru
      _
    // Predicated region
    $region26: #{tpu_custom_call.1} parent=1 // pred_check
      _
    $region27: #{tpu_custom_call.1} parent=1 // pred_check_branch
      %116 = sbr.rel (0) target = $region29
    $region28: #{tpu_custom_call.1} parent=1 // pred_region
      %117 = dma.done [#allocation4], 640
    $region29: #{tpu_custom_call.1} parent=1 // pred_fallthru
      _
    %118 = vsyncpa [#allocation3], 1
    %119 = vsyncpa [#allocation6], 1
    %120 = vsyncpa [#allocation4], 1

</llo_original>
